<compile_context>
chip_gen: v7x
topology: tpu7x:2x2x1
jax: 0.10.0
libtpu: 0.0.40
codegen_flags: <defaults>
</compile_context>

<pallas_src>
import math
import jax
import jax.numpy as jnp
from jax import lax
from jax.experimental import pallas as pl
from jax.experimental.pallas import tpu as pltpu


def _round_up(x, m):
    return ((x + m - 1) // m) * m


def _choose_tn(hout, tn_max=512):
    """Output-hidden tile: prefer an exact divisor of Hout that is a multiple
    of 128, >= 256 wide, and giving >= 2 slabs (one per v7x TensorCore)."""
    if hout <= 128:
        return hout                           # tiny dims: full extent
    cands = [c for c in range(128, min(tn_max, hout) + 1, 128) if hout % c == 0]
    if cands:
        pref = [c for c in cands if c >= 256 and hout // c >= 2]
        return max(pref) if pref else max(cands)
    if hout <= tn_max:
        return hout                           # full extent, no padding (gn == 1)
    # No exact 128-multiple divisor: pad N up to a multiple of a 256-wide tile.
    return 256


def _choose_tm(batch, itemsize, tm_cap=512):
    """Row tile: round the batch up to the packed-sublane minimum and use a
    single row tile for moderate batches (avoids large row padding)."""
    row_align = {4: 8, 2: 16, 1: 32}.get(int(itemsize), 8)
    m_min = _round_up(batch, row_align)
    if m_min <= tm_cap:
        return m_min, m_min                   # (tm, M_pad)
    tm = 256
    return tm, _round_up(m_min, tm)


def bert_pooler_kernel(x_ref, w_ref, b_ref, o_ref):
    # x_ref: (tm, H)   w_ref: (tn, H)  [native nn.Linear layout]
    # b_ref: (1, tn)   o_ref: (tm, tn)
    # x @ W.T on the MXU: contract the last dims of both operands, accumulate f32.
    y = lax.dot_general(
        x_ref[...], w_ref[...],
        dimension_numbers=(((1,), (1,)), ((), ())),
        preferred_element_type=jnp.float32,
    )
    y = y + b_ref[...].astype(jnp.float32)            # f32 epilogue
    o_ref[...] = jnp.tanh(y).astype(o_ref.dtype)


def bert_pooler(hidden_states, weight, bias, *, tn_max=512):
    """BertPooler forward.

    hidden_states: (B, S, H)           (f32 or bf16; bf16 halves weight HBM bytes)
    weight:        (H_out, H)          nn.Linear layout, used as-is (no transpose)
    bias:          (H_out,)            kept f32-precision in the epilogue
    returns:       (B, H_out) in hidden_states.dtype
    """
    B, S, H = hidden_states.shape
    Hout, H_w = weight.shape
    assert H_w == H, (H_w, H)

    # [CLS] extraction — trivial strided slice at trace level (B*H bytes).
    x = hidden_states[:, 0, :]                         # (B, H)
    b2d = bias.reshape(1, Hout)
    out_dtype = hidden_states.dtype

    # ---- Tile selection (no transposed/cast weight copies in the hot path) ----
    tn_eff = _choose_tn(Hout, tn_max)
    Hout_pad = _round_up(Hout, tn_eff)

    tm_eff, M_pad = _choose_tm(B, jnp.dtype(x.dtype).itemsize)

    if M_pad != B:
        x = jnp.pad(x, ((0, M_pad - B), (0, 0)))
    w = weight
    if Hout_pad != Hout:                               # fallback only; BERT sizes hit 0 pad
        w = jnp.pad(w, ((0, Hout_pad - Hout), (0, 0)))
        b2d = jnp.pad(b2d, ((0, 0), (0, Hout_pad - Hout)))

    gn = Hout_pad // tn_eff
    gm = M_pad // tm_eff

    bytes_accessed = (
        x.size * x.dtype.itemsize
        + w.size * w.dtype.itemsize
        + b2d.size * b2d.dtype.itemsize
        + M_pad * Hout_pad * jnp.dtype(out_dtype).itemsize
    )
    cost = pl.CostEstimate(
        flops=2 * M_pad * H * Hout_pad,
        transcendentals=M_pad * Hout_pad,              # tanh
        bytes_accessed=bytes_accessed,
    )

    # Grid: N outer, M inner -> each (tn, H) weight slab is DMA'd exactly once
    # and stays resident while the small row tiles of x stream.  Both axes are
    # independent ("parallel"), so v7x can shard the slabs across its two TCs.
    out = pl.pallas_call(
        bert_pooler_kernel,
        out_shape=jax.ShapeDtypeStruct((M_pad, Hout_pad), out_dtype),
        grid_spec=pltpu.PrefetchScalarGridSpec(
            num_scalar_prefetch=0,
            grid=(gn, gm),
            in_specs=[
                pl.BlockSpec((tm_eff, H), lambda j, i: (i, 0)),     # x rows
                pl.BlockSpec((tn_eff, H), lambda j, i: (j, 0)),     # weight slab (native layout)
                pl.BlockSpec((1, tn_eff), lambda j, i: (0, j)),     # bias slab
            ],
            out_specs=pl.BlockSpec((tm_eff, tn_eff), lambda j, i: (i, j)),
        ),
        compiler_params=pltpu.CompilerParams(
            dimension_semantics=("parallel", "parallel"),
            vmem_limit_bytes=32 * 1024 * 1024,
        ),
        cost_estimate=cost,
    )(x, w, b2d)

    if M_pad != B or Hout_pad != Hout:
        out = out[:B, :Hout]
    return out


if __name__ == "__main__":
    # Small shapes consistent with BertPooler: (batch, seq, hidden) -> (batch, hidden)
    B, S, H = 2, 8, 32

    key = jax.random.PRNGKey(0)
    kx, kw, kb = jax.random.split(key, 3)

    hidden_states = jax.random.normal(kx, (B, S, H), dtype=jnp.float32)
    # nn.Linear(hidden_size, hidden_size): weight (H, H), bias (H,)
    weight = jax.random.normal(kw, (H, H), dtype=jnp.float32) * (1.0 / math.sqrt(H))
    bias = jax.random.normal(kb, (H,), dtype=jnp.float32) * 0.02

    # Reference in plain JAX.
    first_token = hidden_states[:, 0, :]
    ref = jnp.tanh(first_token @ weight.T + bias)

    # f32 path (exact semantics of the PyTorch module).
    out = jax.block_until_ready(bert_pooler(hidden_states, weight, bias))
    assert out.shape == (B, H), out.shape
    assert jnp.allclose(out, ref, atol=1e-4, rtol=1e-4), float(jnp.max(jnp.abs(out - ref)))

    # bf16-operand path (weights/activations cast ONCE outside the hot path;
    # f32 accumulation + f32 bias/tanh epilogue inside the kernel).
    hs_bf16 = hidden_states.astype(jnp.bfloat16)
    w_bf16 = weight.astype(jnp.bfloat16)
    out_bf16 = jax.block_until_ready(bert_pooler(hs_bf16, w_bf16, bias))
    assert out_bf16.shape == (B, H), out_bf16.shape
    assert jnp.allclose(out_bf16.astype(jnp.float32), ref, atol=5e-2, rtol=5e-2), float(
        jnp.max(jnp.abs(out_bf16.astype(jnp.float32) - ref))
    )

    print("KERNEL_OK")
</pallas_src>

<mosaic_0001>
module attributes {stable_mosaic.version = 11 : i64} {
  func.func @bert_pooler_kernel(%arg0: i32, %arg1: i32, %arg2: memref<8x32xf32, #tpu.memory_space<vmem>>, %arg3: memref<32x32xf32, #tpu.memory_space<vmem>>, %arg4: memref<1x32xf32, #tpu.memory_space<vmem>>, %arg5: memref<8x32xf32, #tpu.memory_space<vmem>>) attributes {dimension_semantics = [#tpu.dimension_semantics<parallel>, #tpu.dimension_semantics<parallel>], iteration_bounds = array<i64: 1, 1>, scalar_prefetch = 0 : i64, scratch_operands = 0 : i64, tpu.core_type = #tpu.core_type<tc>, window_params = [{transform_indices = @transform_0, window_bounds = array<i64: 8, 32>}, {transform_indices = @transform_1, window_bounds = array<i64: 32, 32>}, {transform_indices = @transform_2, window_bounds = array<i64: 1, 32>}, {transform_indices = @transform_3, window_bounds = array<i64: 8, 32>}]} {
    %c0 = arith.constant 0 : index
    %c0_0 = arith.constant 0 : index
    %0 = vector.load %arg2[%c0, %c0_0] : memref<8x32xf32, #tpu.memory_space<vmem>>, vector<8x32xf32>
    %c0_1 = arith.constant 0 : index
    %c0_2 = arith.constant 0 : index
    %1 = vector.load %arg3[%c0_1, %c0_2] : memref<32x32xf32, #tpu.memory_space<vmem>>, vector<32x32xf32>
    %cst = arith.constant dense<0.000000e+00> : vector<8x32xf32>
    %2 = tpu.matmul %0, %1, %cst {dimension_numbers = #tpu.dot_dimension_numbers<[1], [1], [0], [0], [0, 0, 1, 0], [], []>} : vector<8x32xf32>, vector<32x32xf32>, vector<8x32xf32> -> vector<8x32xf32>
    %c0_3 = arith.constant 0 : index
    %c0_4 = arith.constant 0 : index
    %3 = vector.load %arg4[%c0_3, %c0_4] : memref<1x32xf32, #tpu.memory_space<vmem>>, vector<1x32xf32>
    %4 = vector.broadcast %3 : vector<1x32xf32> to vector<8x32xf32>
    %5 = arith.addf %2, %4 : vector<8x32xf32>
    %6 = math.tanh %5 : vector<8x32xf32>
    %c0_5 = arith.constant 0 : index
    %c0_6 = arith.constant 0 : index
    %7 = vector.load %arg5[%c0_5, %c0_6] : memref<8x32xf32, #tpu.memory_space<vmem>>, vector<8x32xf32>
    tpu.vector_store %arg5[%c0_5, %c0_6], %6 {strides = array<i32>} : memref<8x32xf32, #tpu.memory_space<vmem>>, vector<8x32xf32>,
    return
  }
  func.func @transform_0(%arg0: i32, %arg1: i32) -> (i32, i32) {
    %c0_i32 = arith.constant 0 : i32
    %c0_i32_0 = arith.constant 0 : i32
    return %arg1, %c0_i32 : i32, i32
  }
  func.func @transform_1(%arg0: i32, %arg1: i32) -> (i32, i32) {
    %c0_i32 = arith.constant 0 : i32
    %c0_i32_0 = arith.constant 0 : i32
    return %arg0, %c0_i32 : i32, i32
  }
  func.func @transform_2(%arg0: i32, %arg1: i32) -> (i32, i32) {
    %c0_i32 = arith.constant 0 : i32
    %c0_i32_0 = arith.constant 0 : i32
    return %c0_i32, %arg0 : i32, i32
  }
  func.func @transform_3(%arg0: i32, %arg1: i32) -> (i32, i32) {
    %c0_i32 = arith.constant 0 : i32
    return %arg1, %arg0 : i32, i32
  }
}

</mosaic_0001>

<llo_original>
// kernel: tpu_custom_call.1
$region0: #{tpu_custom_call.1}
  #allocation0 [shape = 'u32[]', space=smem, size = 0x4, offset = 0x4, fixed_abs, tag = 'smem constant byte address 0x4 - core index']
  #allocation1 [shape = 'u32[144,128]{1,0:T(1,128)}', space=vmem, size = 0x12000, scoped, tag = 'internal scratch']
  %s0 = inlined_call_operand.hbm [shape: f32[8,32], index: 0, kind: input, shape index: {}]
  %s1 = inlined_call_operand.hbm [shape: f32[32,32], index: 1, kind: input, shape index: {}]
  %s2 = inlined_call_operand.vmem [shape: f32[1,32], index: 2, kind: input, shape index: {}]
  %s3 = inlined_call_operand.hbm [shape: f32[8,32], index: 3, kind: output, shape index: {}]
  %s4 = sld [smem:[#allocation0]]
  $region30: #{tpu_custom_call.1} parent=0
    _
  %s6 = ssub.s32 1, %s4
  %s7 = scalar_select 0, %s6, %s4
  $region1: #{tpu_custom_call.1} parent=0
    #allocation2 [shape = 'u8[4096]{0}', space=vmem, size = 0x1000, scoped, tag = 'input window, operand 0, single buffered']
    #allocation3 [shape = 's32[1]{0}', space=sflag, size = 0x4, scoped, tag = 'scoped memory for tpu_custom_call.1']
    #allocation4 [shape = 's32[1]{0}', space=sflag, size = 0x4, scoped, tag = 'scoped memory for tpu_custom_call.1']
    #allocation5 [shape = 'u8[16384]{0}', space=vmem, size = 0x4000, scoped, tag = 'input window, operand 1, single buffered']
    #allocation6 [shape = 's32[1]{0}', space=sflag, size = 0x4, scoped, tag = 'scoped memory for tpu_custom_call.1']
    #allocation7 [shape = 'u8[4096]{0}', space=vmem, size = 0x1000, scoped, tag = 'output window, operand 0, single buffered']
    %8 = vsyncpa [#allocation3], 0
    %9 = vsyncpa [#allocation6], 0
    %10 = vsyncpa [#allocation4], 0
    // Predicated region
    $region2: #{tpu_custom_call.1} parent=1 // pred_check
      _
    $region3: #{tpu_custom_call.1} parent=1 // pred_check_branch
      %12 = sbr.rel (0) target = $region5
    $region4: #{tpu_custom_call.1} parent=1 // pred_region
      %s14 = ssub.s32 128, 128
      %15 = vsyncadd [#allocation3], %s14
      %s17 = sshll.u32 [#allocation2], 4
      %s18 = int_to_ptr.vmem [resolvable:$true] %s17
      %20 = dma.hbm_to_vmem [thread:$0]  %s0, 128, %s18, [#allocation3]
    $region5: #{tpu_custom_call.1} parent=1 // pred_fallthru
      _
    // Predicated region
    $region6: #{tpu_custom_call.1} parent=1 // pred_check
      _
    $region7: #{tpu_custom_call.1} parent=1 // pred_check_branch
      %22 = sbr.rel (0) target = $region9
    $region8: #{tpu_custom_call.1} parent=1 // pred_region
      %s24 = ssub.s32 512, 512
      %25 = vsyncadd [#allocation6], %s24
      %s26 = sshll.u32 [#allocation5], 4
      %s27 = int_to_ptr.vmem [resolvable:$true] %s26
      %32 = dma.hbm_to_vmem [thread:$0]  %s1, 512, %s27, [#allocation6], 128, 128, 8
    $region9: #{tpu_custom_call.1} parent=1 // pred_fallthru
      _
    // Predicated region
    $region10: #{tpu_custom_call.1} parent=1 // pred_check
      _
    $region11: #{tpu_custom_call.1} parent=1 // pred_check_branch
      %34 = sbr.rel (0) target = $region13
    $region12: #{tpu_custom_call.1} parent=1 // pred_region
      _
    $region13: #{tpu_custom_call.1} parent=1 // pred_fallthru
      _
    // Predicated region
    $region14: #{tpu_custom_call.1} parent=1 // pred_check
      _
    $region15: #{tpu_custom_call.1} parent=1 // pred_check_branch
      %36 = sbr.rel (0) target = $region17
    $region16: #{tpu_custom_call.1} parent=1 // pred_region
      %37 = dma.done [#allocation3], 128
    $region17: #{tpu_custom_call.1} parent=1 // pred_fallthru
      _
    // Predicated region
    $region18: #{tpu_custom_call.1} parent=1 // pred_check
      _
    $region19: #{tpu_custom_call.1} parent=1 // pred_check_branch
      %39 = sbr.rel (0) target = $region21
    $region20: #{tpu_custom_call.1} parent=1 // pred_region
      %40 = dma.done [#allocation6], 512
    $region21: #{tpu_custom_call.1} parent=1 // pred_fallthru
      _
    %v41 = vld [vmem:[#allocation2] sm:$0xff]
    %v42 = vld [vmem:[#allocation5] sm:$0xff]
    %v43 = vld [vmem:[#allocation5 + $0x8] sm:$0xff]
    %v44 = vld [vmem:[#allocation5 + $0x10] sm:$0xff]
    %v45 = vld [vmem:[#allocation5 + $0x18] sm:$0xff]
    %v46 = vld [vmem:[%s2] sm:$0x1]
    %v48 = vlaneseq
    %v49 = vshrl.u32 %v48, 7
    %v50 = vsub.s32 0, %v49
    %v51 = vrot.slane %v46, %v50
    %vm53 = vcmask 261120
    %v55 = vsel %vm53, %v41, 0
    %v58 = vsel %vm53, %v42, 0
    %v61 = vsel %vm53, %v43, 0
    %v64 = vsel %vm53, %v44, 0
    %v67 = vsel %vm53, %v45, 0
    %69 = vmatprep.subr.mxu0 0.0
    %70 = vmatpush1.xpose.msra.mxu0 %v58
    %71 = vmatprep.subr.mxu0 0.0
    %72 = vmatpush1.xpose.msra.mxu0 %v61
    %73 = vmatprep.subr.mxu0 0.0
    %74 = vmatpush1.xpose.msra.mxu0 %v64
    %75 = vmatprep.subr.mxu0 0.0
    %76 = vmatpush1.xpose.msra.mxu0 %v67
    %77 = vmatprep.subr.mxu0 0.0
    %78 = vmatpush1.xpose.msra.mxu0 0.0
    %79 = vmatprep.subr.mxu0 0.0
    %80 = vmatpush1.xpose.msra.mxu0 0.0
    %81 = vmatprep.subr.mxu0 0.0
    %82 = vmatpush1.xpose.msra.mxu0 0.0
    %83 = vmatprep.subr.mxu0 0.0
    %84 = vmatpush1.xpose.msra.mxu0 0.0
    %85 = vmatprep.subr.mxu0 0.0
    %86 = vmatpush1.xpose.msra.mxu0 0.0
    %87 = vmatprep.subr.mxu0 0.0
    %88 = vmatpush1.xpose.msra.mxu0 0.0
    %89 = vmatprep.subr.mxu0 0.0
    %90 = vmatpush1.xpose.msra.mxu0 0.0
    %91 = vmatprep.subr.mxu0 0.0
    %92 = vmatpush1.xpose.msra.mxu0 0.0
    %93 = vmatprep.subr.mxu0 0.0
    %94 = vmatpush1.xpose.msra.mxu0 0.0
    %95 = vmatprep.subr.mxu0 0.0
    %96 = vmatpush1.xpose.msra.mxu0 0.0
    %97 = vmatprep.subr.mxu0 0.0
    %98 = vmatpush1.xpose.msra.mxu0 0.0
    %99 = vmatprep.subr.mxu0 0.0
    %100 = vmatpush1.xpose.msra.mxu0 0.0
    %101 = vmatprep.subr.mxu0 0.0
    %102 = vmatpush1.xpose.msra.mxu0 0.0
    %103 = vmatprep.subr.mxu0 0.0
    %104 = vmatpush1.xpose.msra.mxu0 0.0
    %105 = vmatprep.subr.mxu0 0.0
    %106 = vmatpush1.xpose.msra.mxu0 0.0
    %107 = vmatprep.subr.mxu0 0.0
    %108 = vmatpush1.xpose.msra.mxu0 0.0
    %109 = vmatprep.subr.mxu0 0.0
    %110 = vmatpush1.xpose.msra.mxu0 0.0
    %111 = vmatprep.subr.mxu0 0.0
    %112 = vmatpush1.xpose.msra.mxu0 0.0
    %113 = vmatprep.subr.mxu0 0.0
    %114 = vmatpush1.xpose.msra.mxu0 0.0
    %115 = vmatprep.subr.mxu0 0.0
    %116 = vmatpush1.xpose.msra.mxu0 0.0
    %117 = vmatprep.subr.mxu0 0.0
    %118 = vmatpush1.xpose.msra.mxu0 0.0
    %119 = vmatprep.subr.mxu0 0.0
    %120 = vmatpush1.xpose.msra.mxu0 0.0
    %121 = vmatprep.subr.mxu0 0.0
    %122 = vmatpush1.xpose.msra.mxu0 0.0
    %123 = vmatprep.subr.mxu0 0.0
    %124 = vmatpush1.xpose.msra.mxu0 0.0
    %125 = vmatprep.subr.mxu0 0.0
    %126 = vmatpush1.xpose.msra.mxu0 0.0
    %127 = vmatprep.subr.mxu0 0.0
    %128 = vmatpush1.xpose.msra.mxu0 0.0
    %129 = vmatprep.subr.mxu0 0.0
    %130 = vmatpush1.xpose.msra.mxu0 0.0
    %131 = vmatprep.subr.mxu0 0.0
    %132 = vmatpush1.xpose.msra.mxu0 0.0
    %133 = vmatprep.mubr.f32.mxu0 0.0
    %134 = vmatmul.mubr.f32.gmra.mrb[0].mxu0 %v55
    %v135 = vpop.f32.mrb[0].mxu0
    %v136 = vadd.f32 %v51, %v135
    %v137 = vpop.f32.mrb[0].mxu0
    %138 = vdwg.mxu0
    %v139 = vtanh.pop %v136
    %140 = vst.msk [vmem:[#allocation7] sm:$0xff] %vm53, %v139
    // Predicated region
    $region22: #{tpu_custom_call.1} parent=1 // pred_check
      _
    $region23: #{tpu_custom_call.1} parent=1 // pred_check_branch
      %142 = sbr.rel (0) target = $region25
    $region24: #{tpu_custom_call.1} parent=1 // pred_region
      %s144 = ssub.s32 128, 128
      %145 = vsyncadd [#allocation4], %s144
      %s147 = sshll.u32 [#allocation7], 4
      %s148 = int_to_ptr.vmem [resolvable:$true] %s147
      %150 = dma.vmem_to_hbm [thread:$0]  %s148, 128, %s3, [#allocation4]
    $region25: #{tpu_custom_call.1} parent=1 // pred_fallthru
      _
    // Predicated region
    $region26: #{tpu_custom_call.1} parent=1 // pred_check
      _
    $region27: #{tpu_custom_call.1} parent=1 // pred_check_branch
      %152 = sbr.rel (0) target = $region29
    $region28: #{tpu_custom_call.1} parent=1 // pred_region
      %153 = dma.done [#allocation4], 128
    $region29: #{tpu_custom_call.1} parent=1 // pred_fallthru
      _
    %154 = vsyncpa [#allocation3], 1
    %155 = vsyncpa [#allocation6], 1
    %156 = vsyncpa [#allocation4], 1

</llo_original>
